<compile_context>
chip_gen: v7x
topology: tpu7x:2x2x1
jax: 0.10.0
libtpu: 0.0.40
codegen_flags: <defaults>
</compile_context>

<pallas_src>
import jax
import jax.numpy as jnp
from jax.experimental import pallas as pl
from jax.experimental.pallas import tpu as pltpu

LEAKY_SLOPE = 0.01  # nn.LeakyReLU default negative_slope


# --------------------------------------------------------------------------- #
# Kernels
# --------------------------------------------------------------------------- #
def _mlp_kernel_resident(x_ref, *refs):
    """Whole-MLP forward for one batch tile; all parameters VMEM-resident.

    refs = (w0, b0, w1, b1, ..., wL, bL, out_ref).  Weights are bf16, biases f32.
    """
    out_ref = refs[-1]
    param_refs = refs[:-1]
    n_layers = len(param_refs) // 2

    h = x_ref[...]                                  # f32 (tile, F_in)
    for i in range(n_layers):
        w_ref = param_refs[2 * i]
        b = param_refs[2 * i + 1][...]              # f32 (1, out)
        if w_ref.shape[0] == 1:
            # K == 1 matmul is a degenerate MXU push -> VPU broadcast multiply.
            a = h.astype(jnp.float32) * w_ref[...].astype(jnp.float32) + b
        else:
            lhs = h if h.dtype == jnp.bfloat16 else h.astype(jnp.bfloat16)
            a = jnp.dot(lhs, w_ref[...], preferred_element_type=jnp.float32) + b
        if i < n_layers - 1:                        # LeakyReLU on all but last
            a = jnp.where(a > 0, a, LEAKY_SLOPE * a)
            h = a.astype(jnp.bfloat16)              # bf16 inter-layer carry
        else:
            h = a
    out_ref[...] = h.astype(out_ref.dtype)


def _make_stream_kernel(n_layers, stream_outs):
    """Kernel where layer-0's weight and all biases stay VMEM-resident and the
    remaining weights are streamed HBM->VMEM through a 2-deep double buffer."""
    n_stream = n_layers - 1

    def kernel(x_ref, w0_ref, *rest):
        b_refs = rest[:n_layers]
        whbm = rest[n_layers:n_layers + n_stream]
        out_ref = rest[n_layers + n_stream]
        wbuf = rest[n_layers + n_stream + 1]        # VMEM (2, H, max_out) bf16
        sem = rest[n_layers + n_stream + 2]         # DMA sems (2,)

        def _copy(j, slot):
            return pltpu.make_async_copy(
                whbm[j], wbuf.at[slot, :, :stream_outs[j]], sem.at[slot])

        _copy(0, 0).start()                         # prefetch first streamed weight

        # layer 0 (resident): K == 1 -> VPU broadcast; otherwise small MXU matmul.
        b0 = b_refs[0][...]
        if w0_ref.shape[0] == 1:
            a = x_ref[...] * w0_ref[...].astype(jnp.float32) + b0
        else:
            a = jnp.dot(x_ref[...].astype(jnp.bfloat16), w0_ref[...],
                        preferred_element_type=jnp.float32) + b0
        a = jnp.where(a > 0, a, LEAKY_SLOPE * a)
        h = a.astype(jnp.bfloat16)

        for j in range(n_stream):                   # static, unrolled
            slot = j & 1
            _copy(j, slot).wait()
            if j + 1 < n_stream:                    # prefetch next layer's weight
                _copy(j + 1, 1 - slot).start()
            w = wbuf[slot, :, :stream_outs[j]]
            a = jnp.dot(h, w, preferred_element_type=jnp.float32) + b_refs[j + 1][...]
            if j + 1 < n_layers - 1:
                a = jnp.where(a > 0, a, LEAKY_SLOPE * a)
                h = a.astype(jnp.bfloat16)
            else:
                h = a
        out_ref[...] = h.astype(out_ref.dtype)

    return kernel


# --------------------------------------------------------------------------- #
# Wrapper
# --------------------------------------------------------------------------- #
def _round_up(v, m):
    return ((v + m - 1) // m) * m


def _vmem_cap_bytes():
    try:
        info = pltpu.get_tpu_info()
        cap = int(getattr(info, "vmem_capacity_bytes", 0))
        if cap > 0:
            return cap
    except Exception:
        pass
    return 64 << 20   # conservative fallback (v7x per-TensorCore VMEM)


def hl_var_depth_forward(x, params, *, batch_tile=None, out_dtype=jnp.float32,
                         force_stream=False):
    """params: list of (W, b) with W shape (in, out), b shape (1, out).

    Weights are cast to bf16 once here; biases stay f32.  The final layer is
    zero-padded to a multiple of 128 output columns (lane-dense, unmasked stores)
    and the result is sliced back to num_bins.  Numerics are bf16-weight /
    f32-accumulate / bf16-activation (not exact fp32 PyTorch parity).
    """
    B, F_in = x.shape
    n_layers = len(params)
    num_bins = params[-1][0].shape[1]

    # ---- parameter prep: bf16 weights, f32 biases, lane-pad the last layer ----
    prepped = []
    for i, (w, b) in enumerate(params):
        w = jnp.asarray(w)
        b = jnp.asarray(b).reshape(1, -1)
        if i == n_layers - 1:
            nb = w.shape[1]
            nb_pad = _round_up(nb, 128)
            if nb_pad != nb:
                w = jnp.pad(w, ((0, 0), (0, nb_pad - nb)))
                b = jnp.pad(b, ((0, 0), (0, nb_pad - nb)))   # padded cols stay 0
        prepped.append((w.astype(jnp.bfloat16), b.astype(jnp.float32)))
    out_cols = prepped[-1][0].shape[1]
    out_itemsize = jnp.dtype(out_dtype).itemsize

    # ---- batch tiling: multiples of 16 rows, >= 2 grid steps for v7x megacore ----
    if batch_tile is None:
        if B <= 1024:
            batch_tile = max(16, _round_up(pl.cdiv(B, 2), 16))
            B_pad = 2 * batch_tile                  # exactly two grid steps
        else:
            batch_tile = 512
            B_pad = _round_up(B, batch_tile)
    else:
        batch_tile = max(16, _round_up(batch_tile, 16))
        B_pad = _round_up(B, batch_tile)
    if B_pad != B:
        x = jnp.pad(x, ((0, B_pad - B), (0, 0)))
    x = x.astype(jnp.float32)
    grid = (B_pad // batch_tile,)

    # ---- VMEM budget + cost estimate ----
    def _nbytes(a):
        return a.size * a.dtype.itemsize

    param_bytes = sum(_nbytes(w) + _nbytes(b) for w, b in prepped)
    io_tile_bytes = batch_tile * (F_in * 4 + out_cols * out_itemsize)
    max_width = max(w.shape[1] for w, _ in prepped)
    act_bytes = batch_tile * max_width * 6          # live f32 + bf16 activation
    vmem_cap = _vmem_cap_bytes()

    flops = 2 * B_pad * sum(w.shape[0] * w.shape[1] for w, _ in prepped)
    bytes_accessed = _nbytes(x) + param_bytes + B_pad * out_cols * out_itemsize
    cost = pl.CostEstimate(flops=flops, transcendentals=0,
                           bytes_accessed=bytes_accessed)

    stream = (force_stream or (param_bytes > vmem_cap // 2)) and n_layers >= 2

    x_spec = pl.BlockSpec((batch_tile, F_in), lambda i: (i, 0))
    out_spec = pl.BlockSpec((batch_tile, out_cols), lambda i: (i, 0))
    out_shape = jax.ShapeDtypeStruct((B_pad, out_cols), out_dtype)

    if not stream:
        # ------- all weights VMEM-resident, single-buffered (grid-invariant) -------
        in_specs = [x_spec]
        flat_params = []
        for w, b in prepped:
            flat_params.extend([w, b])
            in_specs.append(pl.BlockSpec(w.shape, lambda i: (0, 0),
                                         pipeline_mode=pl.Buffered(1)))
            in_specs.append(pl.BlockSpec(b.shape, lambda i: (0, 0),
                                         pipeline_mode=pl.Buffered(1)))
        vmem_limit = param_bytes + 2 * io_tile_bytes + act_bytes + (8 << 20)
        vmem_limit = int(max(min(vmem_limit, vmem_cap - (2 << 20)), 16 << 20))

        out = pl.pallas_call(
            _mlp_kernel_resident,
            out_shape=out_shape,
            grid_spec=pltpu.PrefetchScalarGridSpec(
                num_scalar_prefetch=0, grid=grid,
                in_specs=in_specs, out_specs=out_spec),
            compiler_params=pltpu.CompilerParams(
                dimension_semantics=("parallel",),
                vmem_limit_bytes=vmem_limit),
            cost_estimate=cost,
        )(x, *flat_params)
    else:
        # ------- layer-streaming: weights 1..L double-buffered from HBM -------
        w0, _ = prepped[0]
        biases = [b for _, b in prepped]
        stream_ws = [w for w, _ in prepped[1:]]
        stream_outs = tuple(w.shape[1] for w in stream_ws)
        h_in = stream_ws[0].shape[0]
        max_out = max(stream_outs)

        in_specs = [x_spec,
                    pl.BlockSpec(w0.shape, lambda i: (0, 0),
                                 pipeline_mode=pl.Buffered(1))]
        in_specs += [pl.BlockSpec(b.shape, lambda i: (0, 0),
                                  pipeline_mode=pl.Buffered(1)) for b in biases]
        in_specs += [pl.BlockSpec(memory_space=pl.ANY) for _ in stream_ws]

        resident_bytes = _nbytes(w0) + sum(_nbytes(b) for b in biases)
        wbuf_bytes = 2 * h_in * max_out * 2
        vmem_limit = (resident_bytes + wbuf_bytes + 2 * io_tile_bytes
                      + act_bytes + (8 << 20))
        vmem_limit = int(max(min(vmem_limit, vmem_cap - (2 << 20)), 16 << 20))

        kernel = _make_stream_kernel(n_layers, stream_outs)
        out = pl.pallas_call(
            kernel,
            out_shape=out_shape,
            grid_spec=pltpu.PrefetchScalarGridSpec(
                num_scalar_prefetch=0, grid=grid,
                in_specs=in_specs, out_specs=out_spec,
                scratch_shapes=[
                    pltpu.VMEM((2, h_in, max_out), jnp.bfloat16),
                    pltpu.SemaphoreType.DMA((2,)),
                ]),
            compiler_params=pltpu.CompilerParams(
                dimension_semantics=("parallel",),
                vmem_limit_bytes=vmem_limit),
            cost_estimate=cost,
        )(x, w0, *biases, *stream_ws)

    return out[:B, :num_bins]


# --------------------------------------------------------------------------- #
# Params + reference
# --------------------------------------------------------------------------- #
def init_params(key, input_size, hidden_size, depth, num_bins):
    """PyTorch-style uniform(-1/sqrt(fan_in), 1/sqrt(fan_in)) init.

    Layer structure matches HLVarDepth: Linear(in,H), (depth-1) x Linear(H,H),
    Linear(H,num_bins); LeakyReLU after all but the last.
    """
    dims = [input_size] + [hidden_size] * depth + [num_bins]
    params = []
    for fan_in, fan_out in zip(dims[:-1], dims[1:]):
        key, kw, kb = jax.random.split(key, 3)
        bound = 1.0 / (fan_in ** 0.5)
        w = jax.random.uniform(kw, (fan_in, fan_out), jnp.float32, -bound, bound)
        b = jax.random.uniform(kb, (1, fan_out), jnp.float32, -bound, bound)
        params.append((w, b))
    return params


def reference_forward(x, params):
    """Mirrors the kernel's numerics: bf16-rounded weights and matmul inputs,
    f32 accumulation, bf16 inter-layer activation carry; K=1 layer on the VPU."""
    h = x.astype(jnp.float32)
    n = len(params)
    for i, (w, b) in enumerate(params):
        wf = w.astype(jnp.bfloat16).astype(jnp.float32)
        bf = b.astype(jnp.float32).reshape(1, -1)
        if w.shape[0] == 1:
            a = h * wf + bf
        else:
            a = jnp.dot(h.astype(jnp.bfloat16).astype(jnp.float32), wf) + bf
        if i < n - 1:
            a = jnp.where(a > 0, a, LEAKY_SLOPE * a)
            h = a.astype(jnp.bfloat16).astype(jnp.float32)
        else:
            h = a
    return h


if __name__ == "__main__":
    # Small shapes consistent with the module's forward: x is (batch, input_size).
    INPUT_SIZE = 1
    HIDDEN_SIZE = 128
    DEPTH = 3
    NUM_BINS = 100
    BATCH = 16

    key = jax.random.PRNGKey(0)
    key, kx = jax.random.split(key)
    x = jax.random.normal(kx, (BATCH, INPUT_SIZE), jnp.float32)
    params = init_params(key, INPUT_SIZE, HIDDEN_SIZE, DEPTH, NUM_BINS)
    ref = reference_forward(x, params)

    # Default (VMEM-resident weights) path.
    out = hl_var_depth_forward(x, params)
    out = jax.block_until_ready(out)
    assert out.shape == (BATCH, NUM_BINS), out.shape
    assert jnp.allclose(out, ref, atol=1e-2, rtol=1e-2), "mismatch vs reference"

    # Also exercise the layer-streaming (manual double-buffered DMA) path.
    out_s = jax.block_until_ready(hl_var_depth_forward(x, params, force_stream=True))
    assert out_s.shape == (BATCH, NUM_BINS), out_s.shape
    assert jnp.allclose(out_s, ref, atol=1e-2, rtol=1e-2), "stream path mismatch"

    print("KERNEL_OK")
</pallas_src>

<mosaic_0001>
module attributes {stable_mosaic.version = 11 : i64} {
  func.func @_mlp_kernel_resident(%arg0: i32, %arg1: memref<16x1xf32, #tpu.memory_space<vmem>>, %arg2: memref<1x128xbf16, #tpu.memory_space<vmem>>, %arg3: memref<1x128xf32, #tpu.memory_space<vmem>>, %arg4: memref<128x128xbf16, #tpu.memory_space<vmem>>, %arg5: memref<1x128xf32, #tpu.memory_space<vmem>>, %arg6: memref<128x128xbf16, #tpu.memory_space<vmem>>, %arg7: memref<1x128xf32, #tpu.memory_space<vmem>>, %arg8: memref<128x128xbf16, #tpu.memory_space<vmem>>, %arg9: memref<1x128xf32, #tpu.memory_space<vmem>>, %arg10: memref<16x128xf32, #tpu.memory_space<vmem>>) attributes {dimension_semantics = [#tpu.dimension_semantics<parallel>], iteration_bounds = array<i64: 2>, scalar_prefetch = 0 : i64, scratch_operands = 0 : i64, tpu.core_type = #tpu.core_type<tc>, window_params = [{transform_indices = @transform_0, window_bounds = array<i64: 16, 1>}, {pipeline_mode = #tpu.pipeline_mode<synchronous>, transform_indices = @transform_1, window_bounds = array<i64: 1, 128>}, {pipeline_mode = #tpu.pipeline_mode<synchronous>, transform_indices = @transform_2, window_bounds = array<i64: 1, 128>}, {pipeline_mode = #tpu.pipeline_mode<synchronous>, transform_indices = @transform_3, window_bounds = array<i64: 128, 128>}, {pipeline_mode = #tpu.pipeline_mode<synchronous>, transform_indices = @transform_4, window_bounds = array<i64: 1, 128>}, {pipeline_mode = #tpu.pipeline_mode<synchronous>, transform_indices = @transform_5, window_bounds = array<i64: 128, 128>}, {pipeline_mode = #tpu.pipeline_mode<synchronous>, transform_indices = @transform_6, window_bounds = array<i64: 1, 128>}, {pipeline_mode = #tpu.pipeline_mode<synchronous>, transform_indices = @transform_7, window_bounds = array<i64: 128, 128>}, {pipeline_mode = #tpu.pipeline_mode<synchronous>, transform_indices = @transform_8, window_bounds = array<i64: 1, 128>}, {transform_indices = @transform_9, window_bounds = array<i64: 16, 128>}]} {
    %c0 = arith.constant 0 : index
    %c0_0 = arith.constant 0 : index
    %0 = vector.load %arg1[%c0, %c0_0] : memref<16x1xf32, #tpu.memory_space<vmem>>, vector<16x1xf32>
    %c0_1 = arith.constant 0 : index
    %c0_2 = arith.constant 0 : index
    %1 = vector.load %arg3[%c0_1, %c0_2] : memref<1x128xf32, #tpu.memory_space<vmem>>, vector<1x128xf32>
    %c0_3 = arith.constant 0 : index
    %c0_4 = arith.constant 0 : index
    %2 = vector.load %arg2[%c0_3, %c0_4] : memref<1x128xbf16, #tpu.memory_space<vmem>>, vector<1x128xbf16>
    %3 = arith.extf %2 : vector<1x128xbf16> to vector<1x128xf32>
    %4 = vector.broadcast %0 : vector<16x1xf32> to vector<16x128xf32>
    %5 = vector.broadcast %3 : vector<1x128xf32> to vector<16x128xf32>
    %6 = arith.mulf %4, %5 : vector<16x128xf32>
    %7 = vector.broadcast %1 : vector<1x128xf32> to vector<16x128xf32>
    %8 = arith.addf %6, %7 : vector<16x128xf32>
    %cst = arith.constant 0.000000e+00 : f32
    %9 = vector.broadcast %cst : f32 to vector<16x128xf32>
    %10 = arith.cmpf ogt, %8, %9 : vector<16x128xf32>
    %cst_5 = arith.constant 0.00999999977 : f32
    %11 = vector.broadcast %cst_5 : f32 to vector<16x128xf32>
    %12 = arith.mulf %11, %8 : vector<16x128xf32>
    %13 = arith.select %10, %8, %12 : vector<16x128xi1>, vector<16x128xf32>
    %14 = arith.truncf %13 : vector<16x128xf32> to vector<16x128xbf16>
    %c0_6 = arith.constant 0 : index
    %c0_7 = arith.constant 0 : index
    %15 = vector.load %arg5[%c0_6, %c0_7] : memref<1x128xf32, #tpu.memory_space<vmem>>, vector<1x128xf32>
    %c0_8 = arith.constant 0 : index
    %c0_9 = arith.constant 0 : index
    %16 = vector.load %arg4[%c0_8, %c0_9] : memref<128x128xbf16, #tpu.memory_space<vmem>>, vector<128x128xbf16>
    %cst_10 = arith.constant dense<0.000000e+00> : vector<16x128xf32>
    %17 = tpu.matmul %14, %16, %cst_10 {dimension_numbers = #tpu.dot_dimension_numbers<[1], [0], [0], [1], [0, 0, 1, 1], [], []>} : vector<16x128xbf16>, vector<128x128xbf16>, vector<16x128xf32> -> vector<16x128xf32>
    %18 = vector.broadcast %15 : vector<1x128xf32> to vector<16x128xf32>
    %19 = arith.addf %17, %18 : vector<16x128xf32>
    %cst_11 = arith.constant 0.000000e+00 : f32
    %20 = vector.broadcast %cst_11 : f32 to vector<16x128xf32>
    %21 = arith.cmpf ogt, %19, %20 : vector<16x128xf32>
    %cst_12 = arith.constant 0.00999999977 : f32
    %22 = vector.broadcast %cst_12 : f32 to vector<16x128xf32>
    %23 = arith.mulf %22, %19 : vector<16x128xf32>
    %24 = arith.select %21, %19, %23 : vector<16x128xi1>, vector<16x128xf32>
    %25 = arith.truncf %24 : vector<16x128xf32> to vector<16x128xbf16>
    %c0_13 = arith.constant 0 : index
    %c0_14 = arith.constant 0 : index
    %26 = vector.load %arg7[%c0_13, %c0_14] : memref<1x128xf32, #tpu.memory_space<vmem>>, vector<1x128xf32>
    %c0_15 = arith.constant 0 : index
    %c0_16 = arith.constant 0 : index
    %27 = vector.load %arg6[%c0_15, %c0_16] : memref<128x128xbf16, #tpu.memory_space<vmem>>, vector<128x128xbf16>
    %cst_17 = arith.constant dense<0.000000e+00> : vector<16x128xf32>
    %28 = tpu.matmul %25, %27, %cst_17 {dimension_numbers = #tpu.dot_dimension_numbers<[1], [0], [0], [1], [0, 0, 1, 1], [], []>} : vector<16x128xbf16>, vector<128x128xbf16>, vector<16x128xf32> -> vector<16x128xf32>
    %29 = vector.broadcast %26 : vector<1x128xf32> to vector<16x128xf32>
    %30 = arith.addf %28, %29 : vector<16x128xf32>
    %cst_18 = arith.constant 0.000000e+00 : f32
    %31 = vector.broadcast %cst_18 : f32 to vector<16x128xf32>
    %32 = arith.cmpf ogt, %30, %31 : vector<16x128xf32>
    %cst_19 = arith.constant 0.00999999977 : f32
    %33 = vector.broadcast %cst_19 : f32 to vector<16x128xf32>
    %34 = arith.mulf %33, %30 : vector<16x128xf32>
    %35 = arith.select %32, %30, %34 : vector<16x128xi1>, vector<16x128xf32>
    %36 = arith.truncf %35 : vector<16x128xf32> to vector<16x128xbf16>
    %c0_20 = arith.constant 0 : index
    %c0_21 = arith.constant 0 : index
    %37 = vector.load %arg9[%c0_20, %c0_21] : memref<1x128xf32, #tpu.memory_space<vmem>>, vector<1x128xf32>
    %c0_22 = arith.constant 0 : index
    %c0_23 = arith.constant 0 : index
    %38 = vector.load %arg8[%c0_22, %c0_23] : memref<128x128xbf16, #tpu.memory_space<vmem>>, vector<128x128xbf16>
    %cst_24 = arith.constant dense<0.000000e+00> : vector<16x128xf32>
    %39 = tpu.matmul %36, %38, %cst_24 {dimension_numbers = #tpu.dot_dimension_numbers<[1], [0], [0], [1], [0, 0, 1, 1], [], []>} : vector<16x128xbf16>, vector<128x128xbf16>, vector<16x128xf32> -> vector<16x128xf32>
    %40 = vector.broadcast %37 : vector<1x128xf32> to vector<16x128xf32>
    %41 = arith.addf %39, %40 : vector<16x128xf32>
    %c0_25 = arith.constant 0 : index
    %c0_26 = arith.constant 0 : index
    %42 = vector.load %arg10[%c0_25, %c0_26] : memref<16x128xf32, #tpu.memory_space<vmem>>, vector<16x128xf32>
    tpu.vector_store %arg10[%c0_25, %c0_26], %41 {strides = array<i32>} : memref<16x128xf32, #tpu.memory_space<vmem>>, vector<16x128xf32>,
    return
  }
  func.func @transform_0(%arg0: i32) -> (i32, i32) {
    %c0_i32 = arith.constant 0 : i32
    %c0_i32_0 = arith.constant 0 : i32
    return %arg0, %c0_i32 : i32, i32
  }
  func.func @transform_1(%arg0: i32) -> (i32, i32) {
    %c0_i32 = arith.constant 0 : i32
    %c0_i32_0 = arith.constant 0 : i32
    %c0_i32_1 = arith.constant 0 : i32
    return %c0_i32, %c0_i32_0 : i32, i32
  }
  func.func @transform_2(%arg0: i32) -> (i32, i32) {
    %c0_i32 = arith.constant 0 : i32
    %c0_i32_0 = arith.constant 0 : i32
    %c0_i32_1 = arith.constant 0 : i32
    return %c0_i32, %c0_i32_0 : i32, i32
  }
  func.func @transform_3(%arg0: i32) -> (i32, i32) {
    %c0_i32 = arith.constant 0 : i32
    %c0_i32_0 = arith.constant 0 : i32
    %c0_i32_1 = arith.constant 0 : i32
    return %c0_i32, %c0_i32_0 : i32, i32
  }
  func.func @transform_4(%arg0: i32) -> (i32, i32) {
    %c0_i32 = arith.constant 0 : i32
    %c0_i32_0 = arith.constant 0 : i32
    %c0_i32_1 = arith.constant 0 : i32
    return %c0_i32, %c0_i32_0 : i32, i32
  }
  func.func @transform_5(%arg0: i32) -> (i32, i32) {
    %c0_i32 = arith.constant 0 : i32
    %c0_i32_0 = arith.constant 0 : i32
    %c0_i32_1 = arith.constant 0 : i32
    return %c0_i32, %c0_i32_0 : i32, i32
  }
  func.func @transform_6(%arg0: i32) -> (i32, i32) {
    %c0_i32 = arith.constant 0 : i32
    %c0_i32_0 = arith.constant 0 : i32
    %c0_i32_1 = arith.constant 0 : i32
    return %c0_i32, %c0_i32_0 : i32, i32
  }
  func.func @transform_7(%arg0: i32) -> (i32, i32) {
    %c0_i32 = arith.constant 0 : i32
    %c0_i32_0 = arith.constant 0 : i32
    %c0_i32_1 = arith.constant 0 : i32
    return %c0_i32, %c0_i32_0 : i32, i32
  }
  func.func @transform_8(%arg0: i32) -> (i32, i32) {
    %c0_i32 = arith.constant 0 : i32
    %c0_i32_0 = arith.constant 0 : i32
    %c0_i32_1 = arith.constant 0 : i32
    return %c0_i32, %c0_i32_0 : i32, i32
  }
  func.func @transform_9(%arg0: i32) -> (i32, i32) {
    %c0_i32 = arith.constant 0 : i32
    %c0_i32_0 = arith.constant 0 : i32
    return %arg0, %c0_i32 : i32, i32
  }
}

</mosaic_0001>

<llo_original>
// kernel: tpu_custom_call.1
$region0: #{tpu_custom_call.1}
  #allocation0 [shape = 'u32[]', space=smem, size = 0x4, offset = 0x4, fixed_abs, tag = 'smem constant byte address 0x4 - core index']
  #allocation1 [shape = 'u32[144,128]{1,0:T(1,128)}', space=vmem, size = 0x12000, scoped, tag = 'internal scratch']
  %s0 = inlined_call_operand.vmem [shape: f32[32,1], index: 0, kind: input, shape index: {}]
  %s1 = inlined_call_operand.vmem [shape: bf16[1,128], index: 1, kind: input, shape index: {}]
  %s2 = inlined_call_operand.vmem [shape: f32[1,128], index: 2, kind: input, shape index: {}]
  %s3 = inlined_call_operand.hbm [shape: bf16[128,128], index: 3, kind: input, shape index: {}]
  %s4 = inlined_call_operand.vmem [shape: f32[1,128], index: 4, kind: input, shape index: {}]
  %s5 = inlined_call_operand.hbm [shape: bf16[128,128], index: 5, kind: input, shape index: {}]
  %s6 = inlined_call_operand.vmem [shape: f32[1,128], index: 6, kind: input, shape index: {}]
  %s7 = inlined_call_operand.hbm [shape: bf16[128,128], index: 7, kind: input, shape index: {}]
  %s8 = inlined_call_operand.vmem [shape: f32[1,128], index: 8, kind: input, shape index: {}]
  %s9 = inlined_call_operand.hbm [shape: f32[32,128], index: 9, kind: output, shape index: {}]
  %s10 = sld [smem:[#allocation0]]
  $region81: #{tpu_custom_call.1} parent=0
    _
  %s12 = ssub.s32 1, %s10
  %s13 = scalar_select 0, %s12, %s10
  $region1: #{tpu_custom_call.1} parent=0
    #allocation2 [shape = 'u8[32768]{0}', space=vmem, size = 0x8000, scoped, tag = 'input window, operand 3, single buffered']
    #allocation3 [shape = 's32[2]{0}', space=sflag, size = 0x8, scoped, tag = 'scoped memory for tpu_custom_call.1']
    #allocation4 [shape = 's32[2]{0}', space=sflag, size = 0x8, scoped, tag = 'scoped memory for tpu_custom_call.1']
    #allocation5 [shape = 'u8[32768]{0}', space=vmem, size = 0x8000, scoped, tag = 'input window, operand 5, single buffered']
    #allocation6 [shape = 's32[1]{0}', space=sflag, size = 0x4, scoped, tag = 'scoped memory for tpu_custom_call.1']
    #allocation7 [shape = 'u8[32768]{0}', space=vmem, size = 0x8000, scoped, tag = 'input window, operand 7, single buffered']
    #allocation8 [shape = 'u8[16384]{0}', space=vmem, size = 0x4000, scoped, tag = 'output window, operand 0']
    %14 = vsyncpa [#allocation3], 0
    %15 = vsyncpa [#allocation6], 0
    %16 = vsyncpa [#allocation4], 0
    %s17 = scalar_lea.sflag [#allocation4], 1
    %18 = vsyncpa %s17, 0
    loop: start=0, step=1, limit=4
    $region2: #{tpu_custom_call.1} parent=1 // loop_pre_header
      _
    $region3: #{tpu_custom_call.1} parent=1 // loop_header
      %s20 = sphi 0, %s24
      %p21 = scmp.ge.s32.totalorder %s20, 4
      %s30 = sphi 0, %s32
      %s33 = sphi 0, %s30
      %s34 = sphi 0, %s33
      %s50 = sphi 0, %s34
      %s54 = sphi 0, %s54
      %s56 = sphi 0, %s54
      %s57 = sphi 0, %s56
      %s71 = sphi 0, %s57
      %s75 = sphi 0, %s75
      %s77 = sphi 0, %s75
      %s78 = sphi 0, %s77
      %s92 = sphi 0, %s78
      %s96 = sphi 0, %s96
      %s98 = sphi 0, %s96
      %s99 = sphi 0, %s98
      %s113 = sphi 0, %s99
      %s117 = sphi 0, %s117
      %s119 = sphi 0, %s117
      %s120 = sphi 0, %s119
      %s134 = sphi 0, %s120
      %s138 = sphi 0, %s138
      %s140 = sphi 0, %s138
      %s141 = sphi 0, %s140
      %s155 = sphi 0, %s141
      %s159 = sphi 0, %s159
      %s161 = sphi 0, %s159
      %s162 = sphi 0, %s161
      %s176 = sphi 0, %s162
      %s180 = sphi 0, %s180
      %s182 = sphi 0, %s180
      %s183 = sphi 0, %s182
      %s197 = sphi 0, %s183
      %s201 = sphi 0, %s201
      %s203 = sphi 0, %s201
      %s204 = sphi 0, %s203
      %s218 = sphi 0, %s204
      %s224 = sphi 0, %s226
      %s227 = sphi 0, %s224
      %s228 = sphi 0, %s227
      %s244 = sphi 0, %s228
    $region4: #{tpu_custom_call.1} parent=1 // loop_header_branch
      %23 = sbr.rel (%p21) target = $region8
    $region5: #{tpu_custom_call.1} parent=1 // loop_body
      %s25 = ssub.s32 %s20, 1
      %s26 = ssub.s32 %s20, 2
      %s27 = sadd.s32 %s20, 1
      %s28 = ssub.s32 %s20, %s27
      %p29 = scmp.eq.s32.totalorder %s28, 0
      %s31 = sadd.s32 %s30, 1
      %s32 = scalar_select %p29, %s30, %s31
      %p35 = pneg %p29
      %p36 = scmp.eq.s32.totalorder %s20, 1
      %p37 = por %p35, %p36
      %p38 = scmp.ne.s32.totalorder %s30, %s33
      %p39 = scmp.eq.s32.totalorder %s20, 0
      %p40 = por %p38, %p39
      %p41 = scmp.ne.s32.totalorder %s30, %s33
      %p42 = scmp.eq.s32.totalorder %s25, 1
      %p43 = por %p41, %p42
      %p44 = scmp.ne.s32.totalorder %s33, %s34
      %p45 = scmp.eq.s32.totalorder %s25, 0
      %p46 = por %p44, %p45
      %p47 = scmp.ne.s32.totalorder %s33, %s34
      %p48 = scmp.eq.s32.totalorder %s26, 1
      %p49 = por %p47, %p48
      %p51 = scmp.ne.s32.totalorder %s34, %s50
      %p52 = scmp.eq.s32.totalorder %s26, 0
      %p53 = por %p51, %p52
      %s55 = sadd.s32 %s54, 1
      %p58 = scmp.eq.s32.totalorder %s20, 1
      %p59 = scmp.ne.s32.totalorder %s54, %s56
      %p60 = scmp.eq.s32.totalorder %s20, 0
      %p61 = por %p59, %p60
      %p62 = scmp.ne.s32.totalorder %s54, %s56
      %p63 = scmp.eq.s32.totalorder %s25, 1
      %p64 = por %p62, %p63
      %p65 = scmp.ne.s32.totalorder %s56, %s57
      %p66 = scmp.eq.s32.totalorder %s25, 0
      %p67 = por %p65, %p66
      %p68 = scmp.ne.s32.totalorder %s56, %s57
      %p69 = scmp.eq.s32.totalorder %s26, 1
      %p70 = por %p68, %p69
      %p72 = scmp.ne.s32.totalorder %s57, %s71
      %p73 = scmp.eq.s32.totalorder %s26, 0
      %p74 = por %p72, %p73
      %s76 = sadd.s32 %s75, 1
      %p79 = scmp.eq.s32.totalorder %s20, 1
      %p80 = scmp.ne.s32.totalorder %s75, %s77
      %p81 = scmp.eq.s32.totalorder %s20, 0
      %p82 = por %p80, %p81
      %p83 = scmp.ne.s32.totalorder %s75, %s77
      %p84 = scmp.eq.s32.totalorder %s25, 1
      %p85 = por %p83, %p84
      %p86 = scmp.ne.s32.totalorder %s77, %s78
      %p87 = scmp.eq.s32.totalorder %s25, 0
      %p88 = por %p86, %p87
      %p89 = scmp.ne.s32.totalorder %s77, %s78
      %p90 = scmp.eq.s32.totalorder %s26, 1
      %p91 = por %p89, %p90
      %p93 = scmp.ne.s32.totalorder %s78, %s92
      %p94 = scmp.eq.s32.totalorder %s26, 0
      %p95 = por %p93, %p94
      %s97 = sadd.s32 %s96, 1
      %p100 = scmp.eq.s32.totalorder %s20, 1
      %p101 = scmp.ne.s32.totalorder %s96, %s98
      %p102 = scmp.eq.s32.totalorder %s20, 0
      %p103 = por %p101, %p102
      %p104 = scmp.ne.s32.totalorder %s96, %s98
      %p105 = scmp.eq.s32.totalorder %s25, 1
      %p106 = por %p104, %p105
      %p107 = scmp.ne.s32.totalorder %s98, %s99
      %p108 = scmp.eq.s32.totalorder %s25, 0
      %p109 = por %p107, %p108
      %p110 = scmp.ne.s32.totalorder %s98, %s99
      %p111 = scmp.eq.s32.totalorder %s26, 1
      %p112 = por %p110, %p111
      %p114 = scmp.ne.s32.totalorder %s99, %s113
      %p115 = scmp.eq.s32.totalorder %s26, 0
      %p116 = por %p114, %p115
      %s118 = sadd.s32 %s117, 1
      %p121 = scmp.eq.s32.totalorder %s20, 1
      %p122 = scmp.ne.s32.totalorder %s117, %s119
      %p123 = scmp.eq.s32.totalorder %s20, 0
      %p124 = por %p122, %p123
      %p125 = scmp.ne.s32.totalorder %s117, %s119
      %p126 = scmp.eq.s32.totalorder %s25, 1
      %p127 = por %p125, %p126
      %p128 = scmp.ne.s32.totalorder %s119, %s120
      %p129 = scmp.eq.s32.totalorder %s25, 0
      %p130 = por %p128, %p129
      %p131 = scmp.ne.s32.totalorder %s119, %s120
      %p132 = scmp.eq.s32.totalorder %s26, 1
      %p133 = por %p131, %p132
      %p135 = scmp.ne.s32.totalorder %s120, %s134
      %p136 = scmp.eq.s32.totalorder %s26, 0
      %p137 = por %p135, %p136
      %s139 = sadd.s32 %s138, 1
      %p142 = scmp.eq.s32.totalorder %s20, 1
      %p143 = scmp.ne.s32.totalorder %s138, %s140
      %p144 = scmp.eq.s32.totalorder %s20, 0
      %p145 = por %p143, %p144
      %p146 = scmp.ne.s32.totalorder %s138, %s140
      %p147 = scmp.eq.s32.totalorder %s25, 1
      %p148 = por %p146, %p147
      %p149 = scmp.ne.s32.totalorder %s140, %s141
      %p150 = scmp.eq.s32.totalorder %s25, 0
      %p151 = por %p149, %p150
      %p152 = scmp.ne.s32.totalorder %s140, %s141
      %p153 = scmp.eq.s32.totalorder %s26, 1
      %p154 = por %p152, %p153
      %p156 = scmp.ne.s32.totalorder %s141, %s155
      %p157 = scmp.eq.s32.totalorder %s26, 0
      %p158 = por %p156, %p157
      %s160 = sadd.s32 %s159, 1
      %p163 = scmp.eq.s32.totalorder %s20, 1
      %p164 = scmp.ne.s32.totalorder %s159, %s161
      %p165 = scmp.eq.s32.totalorder %s20, 0
      %p166 = por %p164, %p165
      %p167 = scmp.ne.s32.totalorder %s159, %s161
      %p168 = scmp.eq.s32.totalorder %s25, 1
      %p169 = por %p167, %p168
      %p170 = scmp.ne.s32.totalorder %s161, %s162
      %p171 = scmp.eq.s32.totalorder %s25, 0
      %p172 = por %p170, %p171
      %p173 = scmp.ne.s32.totalorder %s161, %s162
      %p174 = scmp.eq.s32.totalorder %s26, 1
      %p175 = por %p173, %p174
      %p177 = scmp.ne.s32.totalorder %s162, %s176
      %p178 = scmp.eq.s32.totalorder %s26, 0
      %p179 = por %p177, %p178
      %s181 = sadd.s32 %s180, 1
      %p184 = scmp.eq.s32.totalorder %s20, 1
      %p185 = scmp.ne.s32.totalorder %s180, %s182
      %p186 = scmp.eq.s32.totalorder %s20, 0
      %p187 = por %p185, %p186
      %p188 = scmp.ne.s32.totalorder %s180, %s182
      %p189 = scmp.eq.s32.totalorder %s25, 1
      %p190 = por %p188, %p189
      %p191 = scmp.ne.s32.totalorder %s182, %s183
      %p192 = scmp.eq.s32.totalorder %s25, 0
      %p193 = por %p191, %p192
      %p194 = scmp.ne.s32.totalorder %s182, %s183
      %p195 = scmp.eq.s32.totalorder %s26, 1
      %p196 = por %p194, %p195
      %p198 = scmp.ne.s32.totalorder %s183, %s197
      %p199 = scmp.eq.s32.totalorder %s26, 0
      %p200 = por %p198, %p199
      %s202 = sadd.s32 %s201, 1
      %p205 = scmp.eq.s32.totalorder %s20, 1
      %p206 = scmp.ne.s32.totalorder %s201, %s203
      %p207 = scmp.eq.s32.totalorder %s20, 0
      %p208 = por %p206, %p207
      %p209 = scmp.ne.s32.totalorder %s201, %s203
      %p210 = scmp.eq.s32.totalorder %s25, 1
      %p211 = por %p209, %p210
      %p212 = scmp.ne.s32.totalorder %s203, %s204
      %p213 = scmp.eq.s32.totalorder %s25, 0
      %p214 = por %p212, %p213
      %p215 = scmp.ne.s32.totalorder %s203, %s204
      %p216 = scmp.eq.s32.totalorder %s26, 1
      %p217 = por %p215, %p216
      %p219 = scmp.ne.s32.totalorder %s204, %s218
      %p220 = scmp.eq.s32.totalorder %s26, 0
      %p221 = por %p219, %p220
      %s222 = ssub.s32 %s20, %s27
      %p223 = scmp.eq.s32.totalorder %s222, 0
      %s225 = sadd.s32 %s224, 1
      %s226 = scalar_select %p223, %s224, %s225
      %p229 = pneg %p223
      %p230 = scmp.eq.s32.totalorder %s20, 1
      %p231 = por %p229, %p230
      %p232 = scmp.ne.s32.totalorder %s224, %s227
      %p233 = scmp.eq.s32.totalorder %s20, 0
      %p234 = por %p232, %p233
      %p235 = scmp.ne.s32.totalorder %s224, %s227
      %p236 = scmp.eq.s32.totalorder %s25, 1
      %p237 = por %p235, %p236
      %p238 = scmp.ne.s32.totalorder %s227, %s228
      %p239 = scmp.eq.s32.totalorder %s25, 0
      %p240 = por %p238, %p239
      %p241 = scmp.ne.s32.totalorder %s227, %s228
      %p242 = scmp.eq.s32.totalorder %s26, 1
      %p243 = por %p241, %p242
      %p245 = scmp.ne.s32.totalorder %s228, %s244
      %p246 = scmp.eq.s32.totalorder %s26, 0
      %p247 = por %p245, %p246
      %p248 = scmp.le.s32.totalorder 1, %s20
      %p249 = scmp.lt.s32.totalorder %s20, 3
      %p250 = pnand %p248, %p249
      %p251 = pneg %p250
      // Predicated region
      $region9: #{tpu_custom_call.1} parent=5 // pred_check
        _
      $region10: #{tpu_custom_call.1} parent=5 // pred_check_branch
        %253 = sbr.rel (%p250) target = $region12
      $region11: #{tpu_custom_call.1} parent=5 // pred_region
        %s254 = ssub.s32 %s20, 1
        // Predicated region
        $region13: #{tpu_custom_call.1} parent=11 // pred_check
          %p255 = pneg %p67
        $region14: #{tpu_custom_call.1} parent=11 // pred_check_branch
          %257 = sbr.rel (%p255) target = $region16
        $region15: #{tpu_custom_call.1} parent=11 // pred_region
          _
        $region16: #{tpu_custom_call.1} parent=11 // pred_fallthru
          _
        // Predicated region
        $region17: #{tpu_custom_call.1} parent=11 // pred_check
          %p258 = pneg %p88
        $region18: #{tpu_custom_call.1} parent=11 // pred_check_branch
          %260 = sbr.rel (%p258) target = $region20
        $region19: #{tpu_custom_call.1} parent=11 // pred_region
          _
        $region20: #{tpu_custom_call.1} parent=11 // pred_fallthru
          _
        // Predicated region
        $region21: #{tpu_custom_call.1} parent=11 // pred_check
          %p261 = pneg %p109
        $region22: #{tpu_custom_call.1} parent=11 // pred_check_branch
          %263 = sbr.rel (%p261) target = $region24
        $region23: #{tpu_custom_call.1} parent=11 // pred_region
          %s265 = ssub.s32 1024, 1024
          %266 = vsyncadd [#allocation3], %s265
          %s267 = sshll.u32 [#allocation2], 4
          %s268 = int_to_ptr.vmem [resolvable:$true] %s267
          %273 = dma.hbm_to_vmem [thread:$0]  %s3, 1024, %s268, [#allocation3], 64, 64, 4
        $region24: #{tpu_custom_call.1} parent=11 // pred_fallthru
          _
        // Predicated region
        $region25: #{tpu_custom_call.1} parent=11 // pred_check
          %p274 = pneg %p130
        $region26: #{tpu_custom_call.1} parent=11 // pred_check_branch
          %276 = sbr.rel (%p274) target = $region28
        $region27: #{tpu_custom_call.1} parent=11 // pred_region
          _
        $region28: #{tpu_custom_call.1} parent=11 // pred_fallthru
          _
        // Predicated region
        $region29: #{tpu_custom_call.1} parent=11 // pred_check
          %p277 = pneg %p151
        $region30: #{tpu_custom_call.1} parent=11 // pred_check_branch
          %279 = sbr.rel (%p277) target = $region32
        $region31: #{tpu_custom_call.1} parent=11 // pred_region
          %s281 = ssub.s32 1024, 1024
          %282 = vsyncadd [#allocation6], %s281
          %s283 = sshll.u32 [#allocation5], 4
          %s284 = int_to_ptr.vmem [resolvable:$true] %s283
          %289 = dma.hbm_to_vmem [thread:$0]  %s5, 1024, %s284, [#allocation6], 64, 64, 4
        $region32: #{tpu_custom_call.1} parent=11 // pred_fallthru
          _
        // Predicated region
        $region33: #{tpu_custom_call.1} parent=11 // pred_check
          %p290 = pneg %p172
        $region34: #{tpu_custom_call.1} parent=11 // pred_check_branch
          %292 = sbr.rel (%p290) target = $region36
        $region35: #{tpu_custom_call.1} parent=11 // pred_region
          _
        $region36: #{tpu_custom_call.1} parent=11 // pred_fallthru
          _
        // Predicated region
        $region37: #{tpu_custom_call.1} parent=11 // pred_check
          %p293 = pneg %p193
        $region38: #{tpu_custom_call.1} parent=11 // pred_check_branch
          %295 = sbr.rel (%p293) target = $region40
        $region39: #{tpu_custom_call.1} parent=11 // pred_region
          %s297 = ssub.s32 1024, 1024
          %298 = vsyncadd [#allocation6], %s297
          %s299 = sshll.u32 [#allocation7], 4
          %s300 = int_to_ptr.vmem [resolvable:$true] %s299
          %305 = dma.hbm_to_vmem [thread:$0]  %s7, 1024, %s300, [#allocation6], 64, 64, 4
        $region40: #{tpu_custom_call.1} parent=11 // pred_fallthru
          _
        // Predicated region
        $region41: #{tpu_custom_call.1} parent=11 // pred_check
          %p306 = pneg %p214
        $region42: #{tpu_custom_call.1} parent=11 // pred_check_branch
          %308 = sbr.rel (%p306) target = $region44
        $region43: #{tpu_custom_call.1} parent=11 // pred_region
          _
        $region44: #{tpu_custom_call.1} parent=11 // pred_fallthru
          _
      $region12: #{tpu_custom_call.1} parent=5 // pred_fallthru
        _
      %p309 = scmp.lt.s32.totalorder %s20, 2
      // Predicated region
      $region45: #{tpu_custom_call.1} parent=5 // pred_check
        %p310 = pneg %p309
      $region46: #{tpu_custom_call.1} parent=5 // pred_check_branch
        %312 = sbr.rel (%p310) target = $region48
      $region47: #{tpu_custom_call.1} parent=5 // pred_region
        // Predicated region
        $region49: #{tpu_custom_call.1} parent=47 // pred_check
          %p313 = pneg %p40
        $region50: #{tpu_custom_call.1} parent=47 // pred_check_branch
          %315 = sbr.rel (%p313) target = $region52
        $region51: #{tpu_custom_call.1} parent=47 // pred_region
          %s316 = smul.u32 2, %s20
          %p317 = scmp.lt.s32.totalorder %s316, 3
          %s318 = scalar_select %p317, %s316, 3
          %s319 = smul.addr %s318, 8
          %s320 = scalar_lea.vmem %s0, %s319
          %s321 = smul.u32 2, %s20
        $region52: #{tpu_custom_call.1} parent=47 // pred_fallthru
          _
      $region48: #{tpu_custom_call.1} parent=5 // pred_fallthru
        _
      %p322 = scmp.le.s32.totalorder 1, %s20
      %p323 = scmp.lt.s32.totalorder %s20, 3
      %p324 = pnand %p322, %p323
      %p325 = pneg %p324
      // Predicated region
      $region53: #{tpu_custom_call.1} parent=5 // pred_check
        _
      $region54: #{tpu_custom_call.1} parent=5 // pred_check_branch
        %327 = sbr.rel (%p324) target = $region56
      $region55: #{tpu_custom_call.1} parent=5 // pred_region
        %s328 = ssub.s32 %s20, 1
        // Predicated region
        $region57: #{tpu_custom_call.1} parent=55 // pred_check
          %p329 = pneg %p109
        $region58: #{tpu_custom_call.1} parent=55 // pred_check_branch
          %331 = sbr.rel (%p329) target = $region60
        $region59: #{tpu_custom_call.1} parent=55 // pred_region
          %332 = dma.done [#allocation3], 1024
        $region60: #{tpu_custom_call.1} parent=55 // pred_fallthru
          _
        // Predicated region
        $region61: #{tpu_custom_call.1} parent=55 // pred_check
          %p333 = pneg %p151
        $region62: #{tpu_custom_call.1} parent=55 // pred_check_branch
          %335 = sbr.rel (%p333) target = $region64
        $region63: #{tpu_custom_call.1} parent=55 // pred_region
          %336 = dma.done [#allocation6], 1024
        $region64: #{tpu_custom_call.1} parent=55 // pred_fallthru
          _
        // Predicated region
        $region65: #{tpu_custom_call.1} parent=55 // pred_check
          %p337 = pneg %p193
        $region66: #{tpu_custom_call.1} parent=55 // pred_check_branch
          %339 = sbr.rel (%p337) target = $region68
        $region67: #{tpu_custom_call.1} parent=55 // pred_region
          %340 = dma.done [#allocation6], 1024
        $region68: #{tpu_custom_call.1} parent=55 // pred_fallthru
          _
        %s341 = smul.u32 2, %s25
        %p342 = scmp.lt.s32.totalorder %s341, 3
        %s343 = scalar_select %p342, %s341, 3
        %s344 = smul.addr %s343, 8
        %s345 = scalar_lea.vmem %s0, %s344
        %p346 = pneg %p46
        %p347 = pneg %p43
        %p348 = pneg %p67
        %p349 = pneg %p64
        %p350 = pneg %p88
        %p351 = pneg %p85
        %p352 = pneg %p109
        %p353 = pneg %p106
        %p354 = pneg %p130
        %p355 = pneg %p127
        %p356 = pneg %p151
        %p357 = pneg %p148
        %p358 = pneg %p172
        %p359 = pneg %p169
        %p360 = pneg %p193
        %p361 = pneg %p190
        %p362 = pneg %p214
        %p363 = pneg %p211
        %p364 = pneg %p240
        %p365 = pneg %p237
        %s366 = sand.u32 %s227, 1
        %s367 = scalar_lea.sflag [#allocation4], %s366
        %s368 = sand.u32 %s227, 1
        %s369 = smul.addr %s368, 16
        %s370 = scalar_lea.vmem [#allocation8], %s369
        %s371 = smul.u32 2, %s25
        %p372 = scmp.lt.s32.totalorder %s371, 3
        %s373 = scalar_select %p372, %s371, 3
        %s374 = smul.addr %s373, 8
        %s375 = scalar_lea.vmem %s0, %s374
        %s376 = smul.u32 2, %s25
        %s377 = smul.u32 2, %s25
        %v379 = vld [vmem:[%s375] sm:$0xff]
        %v380 = vld [vmem:[%s375 + $0x8] sm:$0xff]
        %v381 = vld [vmem:[%s2] sm:$0x1]
        %v382 = vld [vmem:[%s1] sm:$0x1]
        %v383 = vunpack.c.l.bf16 %v382
        %385 = vset.pattern.permute.xlu0 0
        %386 = vperm.xlu0 %385, %v379
        %v387 = vpop.permute.xlu0 %386
        %390 = vset.pattern.permute.xlu0 0
        %391 = vperm.xlu0 %390, %v380
        %v392 = vpop.permute.xlu0 %391
        %v394 = vlaneseq
        %v395 = vshrl.u32 %v394, 7
        %v396 = vsub.s32 0, %v395
        %v397 = vrot.slane %v383, %v396
        %v398 = vmul.f32 %v387, %v397
        %v399 = vmul.f32 %v392, %v397
        %v401 = vlaneseq
        %v402 = vshrl.u32 %v401, 7
        %v403 = vsub.s32 0, %v402
        %v404 = vrot.slane %v381, %v403
        %v406 = vadd.f32 %v398, %v404
        %v407 = vadd.f32 %v399, %v404
        %vm408 = vcmp.gt.f32.partialorder %v406, 0.0
        %vm409 = vcmp.gt.f32.partialorder %v407, 0.0
        %v410 = vmul.f32 %v406, 0.01
        %v411 = vmul.f32 %v407, 0.01
        %v412 = vsel %vm408, %v406, %v410
        %v413 = vsel %vm409, %v407, %v411
        %v414 = vpack.c.bf16 %v413, %v412
        %v415 = vld [vmem:[%s4] sm:$0x1]
        %v416 = vld [vmem:[#allocation2] sm:$0xf]
        %v417 = vld [vmem:[#allocation2 + $0x4] sm:$0xf]
        %v418 = vld [vmem:[#allocation2 + $0x8] sm:$0xf]
        %v419 = vld [vmem:[#allocation2 + $0xc] sm:$0xf]
        %v420 = vld [vmem:[#allocation2 + $0x10] sm:$0xf]
        %v421 = vld [vmem:[#allocation2 + $0x14] sm:$0xf]
        %v422 = vld [vmem:[#allocation2 + $0x18] sm:$0xf]
        %v423 = vld [vmem:[#allocation2 + $0x1c] sm:$0xf]
        %v424 = vld [vmem:[#allocation2 + $0x20] sm:$0xf]
        %v425 = vld [vmem:[#allocation2 + $0x24] sm:$0xf]
        %v426 = vld [vmem:[#allocation2 + $0x28] sm:$0xf]
        %v427 = vld [vmem:[#allocation2 + $0x2c] sm:$0xf]
        %v428 = vld [vmem:[#allocation2 + $0x30] sm:$0xf]
        %v429 = vld [vmem:[#allocation2 + $0x34] sm:$0xf]
        %v430 = vld [vmem:[#allocation2 + $0x38] sm:$0xf]
        %v431 = vld [vmem:[#allocation2 + $0x3c] sm:$0xf]
        %v433 = vlaneseq
        %v434 = vshrl.u32 %v433, 7
        %v435 = vsub.s32 0, %v434
        %v436 = vrot.slane %v415, %v435
        %v454 = vunpack.c.l.b16 %v416
        %v455 = vunpack.c.l.b16 %v417
        %v456 = vunpack.c.l.b16 %v418
        %v457 = vunpack.c.l.b16 %v419
        %v458 = vunpack.c.l.b16 %v420
        %v459 = vunpack.c.l.b16 %v421
        %v460 = vunpack.c.l.b16 %v422
        %v461 = vunpack.c.l.b16 %v423
        %v462 = vunpack.c.l.b16 %v424
        %v463 = vunpack.c.l.b16 %v425
        %v464 = vunpack.c.l.b16 %v426
        %v465 = vunpack.c.l.b16 %v427
        %v466 = vunpack.c.l.b16 %v428
        %v467 = vunpack.c.l.b16 %v429
        %v468 = vunpack.c.l.b16 %v430
        %v469 = vunpack.c.l.b16 %v431
        %v470 = vpack.c.b16 %v455, %v454
        %v471 = vpack.c.b16 %v457, %v456
        %v472 = vpack.c.b16 %v459, %v458
        %v473 = vpack.c.b16 %v461, %v460
        %v474 = vpack.c.b16 %v463, %v462
        %v475 = vpack.c.b16 %v465, %v464
        %v476 = vpack.c.b16 %v467, %v466
        %v477 = vpack.c.b16 %v469, %v468
        %486 = vmatprep.subr.bf16.mxu0 0
        %487 = vmatpush1.bf16.msra.mxu0 %v470
        %488 = vmatprep.subr.bf16.mxu0 0
        %489 = vmatpush1.bf16.msra.mxu0 %v471
        %490 = vmatprep.subr.bf16.mxu0 0
        %491 = vmatpush1.bf16.msra.mxu0 %v472
        %492 = vmatprep.subr.bf16.mxu0 0
        %493 = vmatpush1.bf16.msra.mxu0 %v473
        %494 = vmatprep.subr.bf16.mxu0 0
        %495 = vmatpush1.bf16.msra.mxu0 %v474
        %496 = vmatprep.subr.bf16.mxu0 0
        %497 = vmatpush1.bf16.msra.mxu0 %v475
        %498 = vmatprep.subr.bf16.mxu0 0
        %499 = vmatpush1.bf16.msra.mxu0 %v476
        %500 = vmatprep.subr.bf16.mxu0 0
        %501 = vmatpush1.bf16.msra.mxu0 %v477
        %502 = vmatprep.subr.bf16.mxu0 0
        %503 = vmatpush1.bf16.msra.mxu0 0
        %504 = vmatprep.subr.bf16.mxu0 0
        %505 = vmatpush1.bf16.msra.mxu0 0
        %506 = vmatprep.subr.bf16.mxu0 0
        %507 = vmatpush1.bf16.msra.mxu0 0
        %508 = vmatprep.subr.bf16.mxu0 0
        %509 = vmatpush1.bf16.msra.mxu0 0
        %510 = vmatprep.subr.bf16.mxu0 0
        %511 = vmatpush1.bf16.msra.mxu0 0
        %512 = vmatprep.subr.bf16.mxu0 0
        %513 = vmatpush1.bf16.msra.mxu0 0
        %514 = vmatprep.subr.bf16.mxu0 0
        %515 = vmatpush1.bf16.msra.mxu0 0
        %516 = vmatprep.subr.bf16.mxu0 0
        %517 = vmatpush1.bf16.msra.mxu0 0
        %518 = vmatprep.mubr.bf16.mxu0 0
        %519 = vmatmul.mubr.bf16.gmra.mrb[0].mxu0 %v414
        %v520 = vpop.f32.mrb[0].mxu0
        %v521 = vadd.f32 %v436, %v520
        %v522 = vpop.f32.mrb[0].mxu0
        %v523 = vpop.f32.mrb[0].mxu0
        %v524 = vadd.f32 %v436, %v523
        %v525 = vpop.f32.mrb[0].mxu0
        %526 = vdwg.mxu0
        %vm527 = vcmp.gt.f32.partialorder %v521, 0.0
        %vm528 = vcmp.gt.f32.partialorder %v524, 0.0
        %v529 = vmul.f32 %v521, 0.01
        %v530 = vmul.f32 %v524, 0.01
        %v531 = vsel %vm527, %v521, %v529
        %v532 = vsel %vm528, %v524, %v530
        %v533 = vpack.c.bf16 %v532, %v531
        %v534 = vld [vmem:[%s6] sm:$0x1]
        %v535 = vld [vmem:[#allocation5] sm:$0xf]
        %v536 = vld [vmem:[#allocation5 + $0x4] sm:$0xf]
        %v537 = vld [vmem:[#allocation5 + $0x8] sm:$0xf]
        %v538 = vld [vmem:[#allocation5 + $0xc] sm:$0xf]
        %v539 = vld [vmem:[#allocation5 + $0x10] sm:$0xf]
        %v540 = vld [vmem:[#allocation5 + $0x14] sm:$0xf]
        %v541 = vld [vmem:[#allocation5 + $0x18] sm:$0xf]
        %v542 = vld [vmem:[#allocation5 + $0x1c] sm:$0xf]
        %v543 = vld [vmem:[#allocation5 + $0x20] sm:$0xf]
        %v544 = vld [vmem:[#allocation5 + $0x24] sm:$0xf]
        %v545 = vld [vmem:[#allocation5 + $0x28] sm:$0xf]
        %v546 = vld [vmem:[#allocation5 + $0x2c] sm:$0xf]
        %v547 = vld [vmem:[#allocation5 + $0x30] sm:$0xf]
        %v548 = vld [vmem:[#allocation5 + $0x34] sm:$0xf]
        %v549 = vld [vmem:[#allocation5 + $0x38] sm:$0xf]
        %v550 = vld [vmem:[#allocation5 + $0x3c] sm:$0xf]
        %v552 = vlaneseq
        %v553 = vshrl.u32 %v552, 7
        %v554 = vsub.s32 0, %v553
        %v555 = vrot.slane %v534, %v554
        %v573 = vunpack.c.l.b16 %v535
        %v574 = vunpack.c.l.b16 %v536
        %v575 = vunpack.c.l.b16 %v537
        %v576 = vunpack.c.l.b16 %v538
        %v577 = vunpack.c.l.b16 %v539
        %v578 = vunpack.c.l.b16 %v540
        %v579 = vunpack.c.l.b16 %v541
        %v580 = vunpack.c.l.b16 %v542
        %v581 = vunpack.c.l.b16 %v543
        %v582 = vunpack.c.l.b16 %v544
        %v583 = vunpack.c.l.b16 %v545
        %v584 = vunpack.c.l.b16 %v546
        %v585 = vunpack.c.l.b16 %v547
        %v586 = vunpack.c.l.b16 %v548
        %v587 = vunpack.c.l.b16 %v549
        %v588 = vunpack.c.l.b16 %v550
        %v589 = vpack.c.b16 %v574, %v573
        %v590 = vpack.c.b16 %v576, %v575
        %v591 = vpack.c.b16 %v578, %v577
        %v592 = vpack.c.b16 %v580, %v579
        %v593 = vpack.c.b16 %v582, %v581
        %v594 = vpack.c.b16 %v584, %v583
        %v595 = vpack.c.b16 %v586, %v585
        %v596 = vpack.c.b16 %v588, %v587
        %605 = vmatprep.subr.bf16.mxu0 0
        %606 = vmatpush1.bf16.msra.mxu0 %v589
        %607 = vmatprep.subr.bf16.mxu0 0
        %608 = vmatpush1.bf16.msra.mxu0 %v590
        %609 = vmatprep.subr.bf16.mxu0 0
        %610 = vmatpush1.bf16.msra.mxu0 %v591
        %611 = vmatprep.subr.bf16.mxu0 0
        %612 = vmatpush1.bf16.msra.mxu0 %v592
        %613 = vmatprep.subr.bf16.mxu0 0
        %614 = vmatpush1.bf16.msra.mxu0 %v593
        %615 = vmatprep.subr.bf16.mxu0 0
        %616 = vmatpush1.bf16.msra.mxu0 %v594
        %617 = vmatprep.subr.bf16.mxu0 0
        %618 = vmatpush1.bf16.msra.mxu0 %v595
        %619 = vmatprep.subr.bf16.mxu0 0
        %620 = vmatpush1.bf16.msra.mxu0 %v596
        %621 = vmatprep.subr.bf16.mxu0 0
        %622 = vmatpush1.bf16.msra.mxu0 0
        %623 = vmatprep.subr.bf16.mxu0 0
        %624 = vmatpush1.bf16.msra.mxu0 0
        %625 = vmatprep.subr.bf16.mxu0 0
        %626 = vmatpush1.bf16.msra.mxu0 0
        %627 = vmatprep.subr.bf16.mxu0 0
        %628 = vmatpush1.bf16.msra.mxu0 0
        %629 = vmatprep.subr.bf16.mxu0 0
        %630 = vmatpush1.bf16.msra.mxu0 0
        %631 = vmatprep.subr.bf16.mxu0 0
        %632 = vmatpush1.bf16.msra.mxu0 0
        %633 = vmatprep.subr.bf16.mxu0 0
        %634 = vmatpush1.bf16.msra.mxu0 0
        %635 = vmatprep.subr.bf16.mxu0 0
        %636 = vmatpush1.bf16.msra.mxu0 0
        %637 = vmatprep.mubr.bf16.mxu0 0
        %638 = vmatmul.mubr.bf16.gmra.mrb[0].mxu0 %v533
        %v639 = vpop.f32.mrb[0].mxu0
        %v640 = vadd.f32 %v555, %v639
        %v641 = vpop.f32.mrb[0].mxu0
        %v642 = vpop.f32.mrb[0].mxu0
        %v643 = vadd.f32 %v555, %v642
        %v644 = vpop.f32.mrb[0].mxu0
        %645 = vdwg.mxu0
        %vm646 = vcmp.gt.f32.partialorder %v640, 0.0
        %vm647 = vcmp.gt.f32.partialorder %v643, 0.0
        %v648 = vmul.f32 %v640, 0.01
        %v649 = vmul.f32 %v643, 0.01
        %v650 = vsel %vm646, %v640, %v648
        %v651 = vsel %vm647, %v643, %v649
        %v652 = vpack.c.bf16 %v651, %v650
        %v653 = vld [vmem:[%s8] sm:$0x1]
        %v654 = vld [vmem:[#allocation7] sm:$0xf]
        %v655 = vld [vmem:[#allocation7 + $0x4] sm:$0xf]
        %v656 = vld [vmem:[#allocation7 + $0x8] sm:$0xf]
        %v657 = vld [vmem:[#allocation7 + $0xc] sm:$0xf]
        %v658 = vld [vmem:[#allocation7 + $0x10] sm:$0xf]
        %v659 = vld [vmem:[#allocation7 + $0x14] sm:$0xf]
        %v660 = vld [vmem:[#allocation7 + $0x18] sm:$0xf]
        %v661 = vld [vmem:[#allocation7 + $0x1c] sm:$0xf]
        %v662 = vld [vmem:[#allocation7 + $0x20] sm:$0xf]
        %v663 = vld [vmem:[#allocation7 + $0x24] sm:$0xf]
        %v664 = vld [vmem:[#allocation7 + $0x28] sm:$0xf]
        %v665 = vld [vmem:[#allocation7 + $0x2c] sm:$0xf]
        %v666 = vld [vmem:[#allocation7 + $0x30] sm:$0xf]
        %v667 = vld [vmem:[#allocation7 + $0x34] sm:$0xf]
        %v668 = vld [vmem:[#allocation7 + $0x38] sm:$0xf]
        %v669 = vld [vmem:[#allocation7 + $0x3c] sm:$0xf]
        %v671 = vlaneseq
        %v672 = vshrl.u32 %v671, 7
        %v673 = vsub.s32 0, %v672
        %v674 = vrot.slane %v653, %v673
        %v692 = vunpack.c.l.b16 %v654
        %v693 = vunpack.c.l.b16 %v655
        %v694 = vunpack.c.l.b16 %v656
        %v695 = vunpack.c.l.b16 %v657
        %v696 = vunpack.c.l.b16 %v658
        %v697 = vunpack.c.l.b16 %v659
        %v698 = vunpack.c.l.b16 %v660
        %v699 = vunpack.c.l.b16 %v661
        %v700 = vunpack.c.l.b16 %v662
        %v701 = vunpack.c.l.b16 %v663
        %v702 = vunpack.c.l.b16 %v664
        %v703 = vunpack.c.l.b16 %v665
        %v704 = vunpack.c.l.b16 %v666
        %v705 = vunpack.c.l.b16 %v667
        %v706 = vunpack.c.l.b16 %v668
        %v707 = vunpack.c.l.b16 %v669
        %v708 = vpack.c.b16 %v693, %v692
        %v709 = vpack.c.b16 %v695, %v694
        %v710 = vpack.c.b16 %v697, %v696
        %v711 = vpack.c.b16 %v699, %v698
        %v712 = vpack.c.b16 %v701, %v700
        %v713 = vpack.c.b16 %v703, %v702
        %v714 = vpack.c.b16 %v705, %v704
        %v715 = vpack.c.b16 %v707, %v706
        %724 = vmatprep.subr.bf16.mxu0 0
        %725 = vmatpush1.bf16.msra.mxu0 %v708
        %726 = vmatprep.subr.bf16.mxu0 0
        %727 = vmatpush1.bf16.msra.mxu0 %v709
        %728 = vmatprep.subr.bf16.mxu0 0
        %729 = vmatpush1.bf16.msra.mxu0 %v710
        %730 = vmatprep.subr.bf16.mxu0 0
        %731 = vmatpush1.bf16.msra.mxu0 %v711
        %732 = vmatprep.subr.bf16.mxu0 0
        %733 = vmatpush1.bf16.msra.mxu0 %v712
        %734 = vmatprep.subr.bf16.mxu0 0
        %735 = vmatpush1.bf16.msra.mxu0 %v713
        %736 = vmatprep.subr.bf16.mxu0 0
        %737 = vmatpush1.bf16.msra.mxu0 %v714
        %738 = vmatprep.subr.bf16.mxu0 0
        %739 = vmatpush1.bf16.msra.mxu0 %v715
        %740 = vmatprep.subr.bf16.mxu0 0
        %741 = vmatpush1.bf16.msra.mxu0 0
        %742 = vmatprep.subr.bf16.mxu0 0
        %743 = vmatpush1.bf16.msra.mxu0 0
        %744 = vmatprep.subr.bf16.mxu0 0
        %745 = vmatpush1.bf16.msra.mxu0 0
        %746 = vmatprep.subr.bf16.mxu0 0
        %747 = vmatpush1.bf16.msra.mxu0 0
        %748 = vmatprep.subr.bf16.mxu0 0
        %749 = vmatpush1.bf16.msra.mxu0 0
        %750 = vmatprep.subr.bf16.mxu0 0
        %751 = vmatpush1.bf16.msra.mxu0 0
        %752 = vmatprep.subr.bf16.mxu0 0
        %753 = vmatpush1.bf16.msra.mxu0 0
        %754 = vmatprep.subr.bf16.mxu0 0
        %755 = vmatpush1.bf16.msra.mxu0 0
        %756 = vmatprep.mubr.bf16.mxu0 0
        %757 = vmatmul.mubr.bf16.gmra.mrb[0].mxu0 %v652
        %v758 = vpop.f32.mrb[0].mxu0
        %v759 = vadd.f32 %v674, %v758
        %v760 = vpop.f32.mrb[0].mxu0
        %v761 = vpop.f32.mrb[0].mxu0
        %v762 = vadd.f32 %v674, %v761
        %v763 = vpop.f32.mrb[0].mxu0
        %764 = vdwg.mxu0
        %765 = vst [vmem:[%s370] sm:$0xff] %v759
        %766 = vst [vmem:[%s370 + $0x8] sm:$0xff] %v762
        %s767 = sand.u32 %s227, 1
        %s768 = scalar_lea.sflag [#allocation4], %s767
        %s769 = sand.u32 %s227, 1
        %s770 = smul.addr %s769, 16
        %s771 = scalar_lea.vmem [#allocation8], %s770
        // Predicated region
        $region69: #{tpu_custom_call.1} parent=55 // pred_check
          %p772 = pneg %p237
        $region70: #{tpu_custom_call.1} parent=55 // pred_check_branch
          %774 = sbr.rel (%p772) target = $region72
        $region71: #{tpu_custom_call.1} parent=55 // pred_region
          %s775 = smul.u32 2, %s25
          %s777 = ssub.s32 256, 256
          %778 = vsyncadd %s768, %s777
          %s779 = smul.addr %s775, 128
          %s780 = scalar_lea.hbm %s9, %s779
          %s781 = sshll.u32 %s771, 4
          %s782 = int_to_ptr.vmem [resolvable:$true] %s781
          %787 = dma.vmem_to_hbm [thread:$0]  %s782, 256, %s780, %s768, 128, 128, 8
        $region72: #{tpu_custom_call.1} parent=55 // pred_fallthru
          _
      $region56: #{tpu_custom_call.1} parent=5 // pred_fallthru
        _
      %p788 = scmp.le.s32.totalorder 2, %s20
      // Predicated region
      $region73: #{tpu_custom_call.1} parent=5 // pred_check
        %p789 = pneg %p788
      $region74: #{tpu_custom_call.1} parent=5 // pred_check_branch
        %791 = sbr.rel (%p789) target = $region76
      $region75: #{tpu_custom_call.1} parent=5 // pred_region
        %s792 = ssub.s32 %s20, 2
        // Predicated region
        $region77: #{tpu_custom_call.1} parent=75 // pred_check
          %p793 = pneg %p243
        $region78: #{tpu_custom_call.1} parent=75 // pred_check_branch
          %795 = sbr.rel (%p793) target = $region80
        $region79: #{tpu_custom_call.1} parent=75 // pred_region
          %s796 = sand.u32 %s228, 1
          %s797 = scalar_lea.sflag [#allocation4], %s796
          %s798 = sand.u32 %s228, 1
          %s799 = smul.addr %s798, 16
          %s800 = scalar_lea.vmem [#allocation8], %s799
          %801 = dma.done %s797, 256
        $region80: #{tpu_custom_call.1} parent=75 // pred_fallthru
          _
      $region76: #{tpu_custom_call.1} parent=5 // pred_fallthru
        _
    $region6: #{tpu_custom_call.1} parent=1 // loop_footer
      %s24 = sadd.s32 1, %s20
    $region7: #{tpu_custom_call.1} parent=1 // loop_footer_branch
      %19 = sbr.rel target = $region3
    $region8: #{tpu_custom_call.1} parent=1 // loop_exit
      _
    %802 = vsyncpa [#allocation3], 1
    %s803 = scalar_lea.sflag [#allocation3], 1
    %804 = vsyncpa %s803, 1
    %805 = vsyncpa [#allocation6], 1
    %806 = vsyncpa [#allocation4], 1
    %s807 = scalar_lea.sflag [#allocation4], 1
    %808 = vsyncpa %s807, 1

</llo_original>
